<compile_context>
chip_gen: v6e
topology: v6e:2x2x1
jax: 0.10.0
libtpu: 0.0.40
codegen_flags: <defaults>
</compile_context>

<pallas_src>
import jax
import jax.numpy as jnp
from jax.experimental import pallas as pl
from jax.experimental.pallas import tpu as pltpu

_LANES = 128        # lane-dense last dim (full vreg lane width)
_TILE_ROWS = 1024   # 1024 x 128 f32 = 512 KiB per tile


def _linear_kernel(x_ref, wb_ref, o_ref):
    # x_ref / o_ref: (tile_rows, 128) f32 VMEM tiles.
    # wb_ref: (2,) f32 in SMEM -> [weight, bias] scalars read on the scalar path.
    # y = x * w + b  (exactly nn.Linear(1, 1): x @ W^T + b with a 1x1 W).
    o_ref[...] = x_ref[...] * wb_ref[0] + wb_ref[1]


def linear_model_forward(x, w, b):
    """x: (N, 1) float32; w: (1, 1) float32 (PyTorch [out, in] layout); b: (1,) float32."""
    orig_shape = x.shape
    n = x.size
    dtype = x.dtype

    # --- lane-dense reshape + row tiling (all shapes static at trace time) ---
    rows = pl.cdiv(n, _LANES)
    if rows <= _TILE_ROWS:
        tile_rows = rows                 # single block == full array dims (legal)
        rows_pad = rows
    else:
        tile_rows = _TILE_ROWS
        rows_pad = pl.cdiv(rows, _TILE_ROWS) * _TILE_ROWS
    n_pad = rows_pad * _LANES

    x_flat = x.reshape(-1)
    if n_pad != n:
        x_flat = jnp.pad(x_flat, (0, n_pad - n))
    x2d = x_flat.reshape(rows_pad, _LANES)

    # Weight / bias as a tiny SMEM-resident scalar vector.
    wb = jnp.stack([w.reshape(()), b.reshape(())]).astype(dtype)

    grid = (rows_pad // tile_rows,)
    y2d = pl.pallas_call(
        _linear_kernel,
        out_shape=jax.ShapeDtypeStruct((rows_pad, _LANES), dtype),
        grid_spec=pltpu.PrefetchScalarGridSpec(
            num_scalar_prefetch=0,
            grid=grid,
            in_specs=[
                pl.BlockSpec((tile_rows, _LANES), lambda i: (i, 0)),
                pl.BlockSpec(memory_space=pltpu.MemorySpace.SMEM),   # w, b scalars
            ],
            out_specs=pl.BlockSpec((tile_rows, _LANES), lambda i: (i, 0)),
        ),
        compiler_params=pltpu.CompilerParams(
            # No cross-iteration carry -> parallel; lets v7x shard across both TCs.
            dimension_semantics=("parallel",),
        ),
    )(x2d, wb)

    # Drop padding and restore the original (N, 1) layout.
    return y2d.reshape(-1)[:n].reshape(orig_shape)


if __name__ == "__main__":
    key = jax.random.PRNGKey(0)
    kx, kw, kb, kx2 = jax.random.split(key, 4)

    # Small shape consistent with nn.Linear(1, 1): batch of 8 samples, 1 feature.
    N = 8
    x = jax.random.normal(kx, (N, 1), dtype=jnp.float32)

    # Deterministic parameter init (PyTorch default is U(-1, 1) for in_features=1).
    w = jax.random.uniform(kw, (1, 1), minval=-1.0, maxval=1.0, dtype=jnp.float32)
    b = jax.random.uniform(kb, (1,), minval=-1.0, maxval=1.0, dtype=jnp.float32)

    y = jax.block_until_ready(linear_model_forward(x, w, b))
    y_ref = x @ w.T + b
    assert y.shape == (N, 1)
    assert jnp.allclose(y, y_ref, atol=1e-6, rtol=1e-6)

    # Larger batch exercises the padded, multi-tile (grid > 1) lane-dense path.
    N2 = 200_000
    x2 = jax.random.normal(kx2, (N2, 1), dtype=jnp.float32)
    y2 = jax.block_until_ready(linear_model_forward(x2, w, b))
    assert y2.shape == (N2, 1)
    assert jnp.allclose(y2, x2 @ w.T + b, atol=1e-6, rtol=1e-6)

    print("KERNEL_OK")
</pallas_src>

<mosaic_0001>
module attributes {stable_mosaic.version = 11 : i64} {
  func.func @_linear_kernel(%arg0: i32, %arg1: memref<1x128xf32, #tpu.memory_space<vmem>>, %arg2: memref<2xf32, #tpu.memory_space<smem>>, %arg3: memref<1x128xf32, #tpu.memory_space<vmem>>) attributes {dimension_semantics = [#tpu.dimension_semantics<parallel>], iteration_bounds = array<i64: 1>, scalar_prefetch = 0 : i64, scratch_operands = 0 : i64, tpu.core_type = #tpu.core_type<tc>, window_params = [{transform_indices = @transform_0, window_bounds = array<i64: 1, 128>}, {transform_indices = @transform_1, window_bounds = array<i64: 2>}, {transform_indices = @transform_2, window_bounds = array<i64: 1, 128>}]} {
    %c0 = arith.constant 0 : index
    %c0_0 = arith.constant 0 : index
    %0 = vector.load %arg1[%c0, %c0_0] : memref<1x128xf32, #tpu.memory_space<vmem>>, vector<1x128xf32>
    %c0_1 = arith.constant 0 : index
    %1 = memref.load %arg2[%c0_1] : memref<2xf32, #tpu.memory_space<smem>>
    %2 = vector.broadcast %1 : f32 to vector<1x128xf32>
    %3 = arith.mulf %0, %2 : vector<1x128xf32>
    %c1 = arith.constant 1 : index
    %4 = memref.load %arg2[%c1] : memref<2xf32, #tpu.memory_space<smem>>
    %5 = vector.broadcast %4 : f32 to vector<1x128xf32>
    %6 = arith.addf %3, %5 : vector<1x128xf32>
    %c0_2 = arith.constant 0 : index
    %c0_3 = arith.constant 0 : index
    %7 = vector.load %arg3[%c0_2, %c0_3] : memref<1x128xf32, #tpu.memory_space<vmem>>, vector<1x128xf32>
    tpu.vector_store %arg3[%c0_2, %c0_3], %6 {strides = array<i32>} : memref<1x128xf32, #tpu.memory_space<vmem>>, vector<1x128xf32>,
    return
  }
  func.func @transform_0(%arg0: i32) -> (i32, i32) {
    %c0_i32 = arith.constant 0 : i32
    %c0_i32_0 = arith.constant 0 : i32
    return %arg0, %c0_i32 : i32, i32
  }
  func.func @transform_1(%arg0: i32) -> i32 {
    %c0_i32 = arith.constant 0 : i32
    %c0_i32_0 = arith.constant 0 : i32
    return %c0_i32 : i32
  }
  func.func @transform_2(%arg0: i32) -> (i32, i32) {
    %c0_i32 = arith.constant 0 : i32
    %c0_i32_0 = arith.constant 0 : i32
    return %arg0, %c0_i32 : i32, i32
  }
}

</mosaic_0001>

<llo_original>
// kernel: tpu_custom_call.1
$region0: #{tpu_custom_call.1}
  #allocation0 [shape = 'u32[]', space=smem, size = 0x4, offset = 0x4, fixed_abs, tag = 'smem constant byte address 0x4 - core index']
  #allocation1 [shape = 'u32[144,128]{1,0:T(1,128)}', space=vmem, size = 0x12000, scoped, tag = 'internal scratch']
  %s0 = inlined_call_operand.hbm [shape: f32[1,128], index: 0, kind: input, shape index: {}]
  %s1 = inlined_call_operand.vmem [shape: f32[2], index: 1, kind: input, shape index: {}]
  %s2 = inlined_call_operand.hbm [shape: f32[1,128], index: 2, kind: output, shape index: {}]
  %s3 = sld [smem:[#allocation0]]
  $region26: #{tpu_custom_call.1} parent=0
    _
  %s5 = ssub.s32 1, %s3
  %s6 = scalar_select 0, %s5, %s3
  $region1: #{tpu_custom_call.1} parent=0
    #allocation2 [shape = 'u8[512]{0}', space=vmem, size = 0x400, scoped, tag = 'input window, operand 0, single buffered']
    #allocation3 [shape = 's32[1]{0}', space=sflag, size = 0x4, scoped, tag = 'scoped memory for tpu_custom_call.1']
    #allocation4 [shape = 's32[1]{0}', space=sflag, size = 0x4, scoped, tag = 'scoped memory for tpu_custom_call.1']
    #allocation5 [shape = 's32[1]{0}', space=sflag, size = 0x4, scoped, tag = 'scoped memory for tpu_custom_call.1']
    #allocation6 [shape = 'u8[512]{0}', space=smem, size = 0x200, scoped, tag = 'input window, operand 1, single buffered']
    #allocation7 [shape = 'u8[512]{0}', space=vmem, size = 0x400, scoped, tag = 'output window, operand 0, single buffered']
    %7 = vsyncpa [#allocation3], 0
    %8 = vsyncpa [#allocation5], 0
    %9 = vsyncpa [#allocation4], 0
    // Predicated region
    $region2: #{tpu_custom_call.1} parent=1 // pred_check
      _
    $region3: #{tpu_custom_call.1} parent=1 // pred_check_branch
      %11 = sbr.rel (0) target = $region5
    $region4: #{tpu_custom_call.1} parent=1 // pred_region
      %s13 = ssub.s32 16, 16
      %14 = vsyncadd [#allocation3], %s13
      %s16 = sshll.u32 [#allocation2], 4
      %s17 = int_to_ptr.vmem [resolvable:$true] %s16
      %19 = dma.hbm_to_vmem [thread:$0]  %s0, 16, %s17, [#allocation3]
    $region5: #{tpu_custom_call.1} parent=1 // pred_fallthru
      _
    // Predicated region
    $region6: #{tpu_custom_call.1} parent=1 // pred_check
      _
    $region7: #{tpu_custom_call.1} parent=1 // pred_check_branch
      %21 = sbr.rel (0) target = $region9
    $region8: #{tpu_custom_call.1} parent=1 // pred_region
      %s23 = ssub.s32 16, 16
      %24 = vsyncadd [#allocation5], %s23
      %s26 = sshll.u32 %s1, 4
      %s27 = int_to_ptr.vmem [resolvable:$true] %s26
      %29 = dma.vmem_to_smem %s27, 16, [#allocation6], [#allocation5]
    $region9: #{tpu_custom_call.1} parent=1 // pred_fallthru
      _
    // Predicated region
    $region10: #{tpu_custom_call.1} parent=1 // pred_check
      _
    $region11: #{tpu_custom_call.1} parent=1 // pred_check_branch
      %31 = sbr.rel (0) target = $region13
    $region12: #{tpu_custom_call.1} parent=1 // pred_region
      %32 = dma.done [#allocation3], 16
    $region13: #{tpu_custom_call.1} parent=1 // pred_fallthru
      _
    // Predicated region
    $region14: #{tpu_custom_call.1} parent=1 // pred_check
      _
    $region15: #{tpu_custom_call.1} parent=1 // pred_check_branch
      %34 = sbr.rel (0) target = $region17
    $region16: #{tpu_custom_call.1} parent=1 // pred_region
      %35 = dma.done [#allocation5], 16
    $region17: #{tpu_custom_call.1} parent=1 // pred_fallthru
      _
    %36 = sfence
    %v37 = vld [vmem:[#allocation2] sm:$0x1]
    %s38 = sld [smem:[#allocation6]]
    %v39 = vstv %s38
    %v40 = vmul.f32 %v37, %v39
    %s41 = sld [smem:[#allocation6 + $0x1]]
    %v42 = vstv %s41
    %v43 = vadd.f32 %v40, %v42
    %44 = vst [vmem:[#allocation7] sm:$0x1] %v43
    // Predicated region
    $region18: #{tpu_custom_call.1} parent=1 // pred_check
      _
    $region19: #{tpu_custom_call.1} parent=1 // pred_check_branch
      %46 = sbr.rel (0) target = $region21
    $region20: #{tpu_custom_call.1} parent=1 // pred_region
      %s48 = ssub.s32 16, 16
      %49 = vsyncadd [#allocation4], %s48
      %s51 = sshll.u32 [#allocation7], 4
      %s52 = int_to_ptr.vmem [resolvable:$true] %s51
      %54 = dma.vmem_to_hbm [thread:$0]  %s52, 16, %s2, [#allocation4]
    $region21: #{tpu_custom_call.1} parent=1 // pred_fallthru
      _
    // Predicated region
    $region22: #{tpu_custom_call.1} parent=1 // pred_check
      _
    $region23: #{tpu_custom_call.1} parent=1 // pred_check_branch
      %56 = sbr.rel (0) target = $region25
    $region24: #{tpu_custom_call.1} parent=1 // pred_region
      %57 = dma.done [#allocation4], 16
    $region25: #{tpu_custom_call.1} parent=1 // pred_fallthru
      _
    %58 = vsyncpa [#allocation3], 1
    %59 = vsyncpa [#allocation4], 1
    %60 = vsyncpa [#allocation5], 1

</llo_original>
